<compile_context>
chip_gen: v7x
topology: tpu7x:2x2x1
jax: 0.10.0
libtpu: 0.0.40
codegen_flags: <defaults>
</compile_context>

<pallas_src>
import jax
import jax.numpy as jnp
from jax import lax
from jax.experimental import pallas as pl
from jax.experimental.pallas import tpu as pltpu

IN_FEATURES = 5
HIDDEN = 16
OUT_FEATURES = 5

# Largest batch tile per grid step.  Binding constraint is VMEM: the native (TILE_B, 5) f32 input
# block is lane-padded to 128 lanes (512 B/row), so 8192 rows -> 4 MiB per buffer, double-buffered,
# plus the (16, TILE_B) f32 hidden temp (~0.5 MiB) and the double-buffered (8-sublane, TILE_B)
# output window.  Multiple of both 8 and 128 so multi-tile BlockSpecs are always legal.
MAX_TILE_B = 8192


def mlp_kernel(x_ref, w1_ref, b1_ref, w2_ref, b2_ref, o_ref):
    """One batch tile: logits[:, tile] = W2 @ relu(W1 @ x_tile^T + b1) + b2.

    x_ref : (TILE_B, IN)   native row-major batch tile (no wrapper transpose pass)
    w1_ref: (HIDDEN, IN)   torch fc1.weight layout, resident in VMEM across all steps
    b1_ref: (HIDDEN, 1)
    w2_ref: (OUT, HIDDEN)  torch fc2.weight layout, resident in VMEM across all steps
    b2_ref: (OUT, 1)
    o_ref : (OUT, TILE_B)  lane-dense output tile (batch on the lane axis)
    """
    x = x_ref[...]  # (TILE_B, IN)

    # fc1 on the MXU.  The transpose of x is folded into the contraction (contract x's feature
    # axis, the classic q @ k.T pattern), so the lane-dense (HIDDEN, TILE_B) hidden activation
    # comes straight out of the matrix unit -- no VPU MAC loops, no materialized transpose.
    h = lax.dot_general(
        w1_ref[...], x,
        dimension_numbers=(((1,), (1,)), ((), ())),
        preferred_element_type=jnp.float32,
        precision=lax.Precision.HIGHEST,       # keep f32-level parity with the reference
    )                                          # (HIDDEN, TILE_B)
    h = jnp.maximum(h + b1_ref[...], 0.0)      # bias + ReLU on the VPU (b1 broadcasts over lanes)

    # fc2 on the MXU, canonical (M, K) x (K, N).
    y = lax.dot_general(
        w2_ref[...], h,
        dimension_numbers=(((1,), (0,)), ((), ())),
        preferred_element_type=jnp.float32,
        precision=lax.Precision.HIGHEST,
    )                                          # (OUT, TILE_B)

    # Lane-dense store: full-width vst, no masked partial stores.
    o_ref[...] = (y + b2_ref[...]).astype(o_ref.dtype)


def simple_classifier(x, w1, b1, w2, b2):
    """Forward pass of SimpleClassifier.

    x:  (B, 5) float32
    w1: (16, 5), b1: (16,)   -- fc1 weight/bias, torch layout
    w2: (5, 16), b2: (5,)    -- fc2 weight/bias, torch layout
    returns (B, 5) float32 logits (no softmax, matching the torch forward).
    """
    B = x.shape[0]
    if B <= MAX_TILE_B:
        # Single tile: block shape == full array shape is always legal (no 8/128 divisibility
        # requirement), so no padding and no ragged handling are needed.
        tile_b = B
    else:
        # Multi-tile: TILE_B is a multiple of (8, 128); the ragged last block is handled by
        # Pallas's block masking (OOB reads are sliced-off garbage columns, OOB writes dropped),
        # so x is NOT padded up to a multiple of TILE_B.
        tile_b = MAX_TILE_B
    num_tiles = pl.cdiv(B, tile_b)

    x = x.astype(jnp.float32)
    w1 = w1.astype(jnp.float32)
    w2 = w2.astype(jnp.float32)
    b1c = b1.reshape(HIDDEN, 1).astype(jnp.float32)
    b2c = b2.reshape(OUT_FEATURES, 1).astype(jnp.float32)

    flops = 2 * B * (IN_FEATURES * HIDDEN + HIDDEN * OUT_FEATURES)
    bytes_accessed = 4 * (B * IN_FEATURES + B * OUT_FEATURES
                          + HIDDEN * IN_FEATURES + HIDDEN
                          + OUT_FEATURES * HIDDEN + OUT_FEATURES)

    out_t = pl.pallas_call(
        mlp_kernel,
        out_shape=jax.ShapeDtypeStruct((OUT_FEATURES, B), jnp.float32),
        grid=(num_tiles,),
        in_specs=[
            # Streamed batch tiles, read in native (B, 5) row-major layout -> no extra
            # pad/transpose HBM pass in the wrapper.
            pl.BlockSpec((tile_b, IN_FEATURES), lambda i: (i, 0)),
            # Tiny weights/biases (<2 KiB total): constant index_maps keep them resident in VMEM.
            pl.BlockSpec((HIDDEN, IN_FEATURES), lambda i: (0, 0)),
            pl.BlockSpec((HIDDEN, 1), lambda i: (0, 0)),
            pl.BlockSpec((OUT_FEATURES, HIDDEN), lambda i: (0, 0)),
            pl.BlockSpec((OUT_FEATURES, 1), lambda i: (0, 0)),
        ],
        out_specs=pl.BlockSpec((OUT_FEATURES, tile_b), lambda i: (0, i)),
        compiler_params=pltpu.CompilerParams(
            dimension_semantics=("parallel",),     # v7x: shard batch tiles over both TensorCores
            vmem_limit_bytes=32 * 1024 * 1024,     # explicit budget, safe on v5e/v6e/v7x
        ),
        cost_estimate=pl.CostEstimate(
            flops=flops, transcendentals=0, bytes_accessed=bytes_accessed),
    )(x, w1, b1c, w2, b2c)

    # Logits come out lane-dense as (OUT, B).  A consumer reducing over classes (argmax/softmax
    # over axis 0) could take that layout directly and skip this; we transpose once here only to
    # keep the torch (B, OUT) return contract.
    return out_t.T


if __name__ == "__main__":
    key = jax.random.PRNGKey(0)
    kx, k1, k2, k3, k4 = jax.random.split(key, 5)
    batch = 8
    x = jax.random.normal(kx, (batch, IN_FEATURES), jnp.float32)
    # Parameters in torch nn.Linear layout: fc1 (16,5)+(16,), fc2 (5,16)+(5,)
    w1 = jax.random.normal(k1, (HIDDEN, IN_FEATURES), jnp.float32) * 0.1
    b1 = jax.random.normal(k2, (HIDDEN,), jnp.float32) * 0.1
    w2 = jax.random.normal(k3, (OUT_FEATURES, HIDDEN), jnp.float32) * 0.1
    b2 = jax.random.normal(k4, (OUT_FEATURES,), jnp.float32) * 0.1

    out = simple_classifier(x, w1, b1, w2, b2)
    out = jax.block_until_ready(out)

    # Reference check in plain JAX (same math as the torch forward), f32-accurate matmuls.
    ref_h = jnp.maximum(jnp.dot(x, w1.T, precision=lax.Precision.HIGHEST) + b1, 0.0)
    ref = jnp.dot(ref_h, w2.T, precision=lax.Precision.HIGHEST) + b2
    assert out.shape == (batch, OUT_FEATURES)
    assert jnp.allclose(out, ref, atol=1e-5), "mismatch vs reference"
    print("KERNEL_OK")
</pallas_src>

<mosaic_0001>
module attributes {stable_mosaic.version = 11 : i64} {
  func.func @mlp_kernel(%arg0: i32, %arg1: memref<8x5xf32, #tpu.memory_space<vmem>>, %arg2: memref<16x5xf32, #tpu.memory_space<vmem>>, %arg3: memref<16x1xf32, #tpu.memory_space<vmem>>, %arg4: memref<5x16xf32, #tpu.memory_space<vmem>>, %arg5: memref<5x1xf32, #tpu.memory_space<vmem>>, %arg6: memref<5x8xf32, #tpu.memory_space<vmem>>) attributes {dimension_semantics = [#tpu.dimension_semantics<parallel>], iteration_bounds = array<i64: 1>, scalar_prefetch = 0 : i64, scratch_operands = 0 : i64, tpu.core_type = #tpu.core_type<tc>, window_params = [{transform_indices = @transform_0, window_bounds = array<i64: 8, 5>}, {pipeline_mode = #tpu.pipeline_mode<synchronous>, transform_indices = @transform_1, window_bounds = array<i64: 16, 5>}, {pipeline_mode = #tpu.pipeline_mode<synchronous>, transform_indices = @transform_2, window_bounds = array<i64: 16, 1>}, {pipeline_mode = #tpu.pipeline_mode<synchronous>, transform_indices = @transform_3, window_bounds = array<i64: 5, 16>}, {pipeline_mode = #tpu.pipeline_mode<synchronous>, transform_indices = @transform_4, window_bounds = array<i64: 5, 1>}, {transform_indices = @transform_5, window_bounds = array<i64: 5, 8>}]} {
    %c0 = arith.constant 0 : index
    %c0_0 = arith.constant 0 : index
    %0 = vector.load %arg1[%c0, %c0_0] : memref<8x5xf32, #tpu.memory_space<vmem>>, vector<8x5xf32>
    %c0_1 = arith.constant 0 : index
    %c0_2 = arith.constant 0 : index
    %1 = vector.load %arg2[%c0_1, %c0_2] : memref<16x5xf32, #tpu.memory_space<vmem>>, vector<16x5xf32>
    %cst = arith.constant dense<0.000000e+00> : vector<16x8xf32>
    %2 = tpu.matmul %1, %0, %cst {dimension_numbers = #tpu.dot_dimension_numbers<[1], [1], [0], [0], [0, 0, 1, 0], [], []>, precision = #tpu.contract_precision<fp32>} : vector<16x5xf32>, vector<8x5xf32>, vector<16x8xf32> -> vector<16x8xf32>
    %c0_3 = arith.constant 0 : index
    %c0_4 = arith.constant 0 : index
    %3 = vector.load %arg3[%c0_3, %c0_4] : memref<16x1xf32, #tpu.memory_space<vmem>>, vector<16x1xf32>
    %4 = vector.broadcast %3 : vector<16x1xf32> to vector<16x8xf32>
    %5 = arith.addf %2, %4 : vector<16x8xf32>
    %cst_5 = arith.constant 0.000000e+00 : f32
    %6 = vector.broadcast %cst_5 : f32 to vector<16x8xf32>
    %7 = arith.maximumf %5, %6 : vector<16x8xf32>
    %c0_6 = arith.constant 0 : index
    %c0_7 = arith.constant 0 : index
    %8 = vector.load %arg4[%c0_6, %c0_7] : memref<5x16xf32, #tpu.memory_space<vmem>>, vector<5x16xf32>
    %cst_8 = arith.constant dense<0.000000e+00> : vector<5x8xf32>
    %9 = tpu.matmul %8, %7, %cst_8 {dimension_numbers = #tpu.dot_dimension_numbers<[1], [0], [0], [1], [0, 0, 1, 1], [], []>, precision = #tpu.contract_precision<fp32>} : vector<5x16xf32>, vector<16x8xf32>, vector<5x8xf32> -> vector<5x8xf32>
    %c0_9 = arith.constant 0 : index
    %c0_10 = arith.constant 0 : index
    %10 = vector.load %arg5[%c0_9, %c0_10] : memref<5x1xf32, #tpu.memory_space<vmem>>, vector<5x1xf32>
    %11 = vector.broadcast %10 : vector<5x1xf32> to vector<5x8xf32>
    %12 = arith.addf %9, %11 : vector<5x8xf32>
    %c0_11 = arith.constant 0 : index
    %c0_12 = arith.constant 0 : index
    %13 = vector.load %arg6[%c0_11, %c0_12] : memref<5x8xf32, #tpu.memory_space<vmem>>, vector<5x8xf32>
    tpu.vector_store %arg6[%c0_11, %c0_12], %12 {strides = array<i32>} : memref<5x8xf32, #tpu.memory_space<vmem>>, vector<5x8xf32>,
    return
  }
  func.func @transform_0(%arg0: i32) -> (i32, i32) {
    %c0_i32 = arith.constant 0 : i32
    %c0_i32_0 = arith.constant 0 : i32
    return %arg0, %c0_i32 : i32, i32
  }
  func.func @transform_1(%arg0: i32) -> (i32, i32) {
    %c0_i32 = arith.constant 0 : i32
    %c0_i32_0 = arith.constant 0 : i32
    %c0_i32_1 = arith.constant 0 : i32
    return %c0_i32, %c0_i32_0 : i32, i32
  }
  func.func @transform_2(%arg0: i32) -> (i32, i32) {
    %c0_i32 = arith.constant 0 : i32
    %c0_i32_0 = arith.constant 0 : i32
    %c0_i32_1 = arith.constant 0 : i32
    return %c0_i32, %c0_i32_0 : i32, i32
  }
  func.func @transform_3(%arg0: i32) -> (i32, i32) {
    %c0_i32 = arith.constant 0 : i32
    %c0_i32_0 = arith.constant 0 : i32
    %c0_i32_1 = arith.constant 0 : i32
    return %c0_i32, %c0_i32_0 : i32, i32
  }
  func.func @transform_4(%arg0: i32) -> (i32, i32) {
    %c0_i32 = arith.constant 0 : i32
    %c0_i32_0 = arith.constant 0 : i32
    %c0_i32_1 = arith.constant 0 : i32
    return %c0_i32, %c0_i32_0 : i32, i32
  }
  func.func @transform_5(%arg0: i32) -> (i32, i32) {
    %c0_i32 = arith.constant 0 : i32
    %c0_i32_0 = arith.constant 0 : i32
    return %c0_i32, %arg0 : i32, i32
  }
}

</mosaic_0001>

<llo_original>
// kernel: tpu_custom_call.1
$region0: #{tpu_custom_call.1}
  #allocation0 [shape = 'u32[]', space=smem, size = 0x4, offset = 0x4, fixed_abs, tag = 'smem constant byte address 0x4 - core index']
  #allocation1 [shape = 'u32[144,128]{1,0:T(1,128)}', space=vmem, size = 0x12000, scoped, tag = 'internal scratch']
  %s0 = inlined_call_operand.vmem [shape: f32[8,5], index: 0, kind: input, shape index: {}]
  %s1 = inlined_call_operand.vmem [shape: f32[16,5], index: 1, kind: input, shape index: {}]
  %s2 = inlined_call_operand.vmem [shape: f32[16,1], index: 2, kind: input, shape index: {}]
  %s3 = inlined_call_operand.vmem [shape: f32[5,16], index: 3, kind: input, shape index: {}]
  %s4 = inlined_call_operand.vmem [shape: f32[5,1], index: 4, kind: input, shape index: {}]
  %s5 = inlined_call_operand.hbm [shape: f32[5,8], index: 5, kind: output, shape index: {}]
  %s6 = sld [smem:[#allocation0]]
  $region30: #{tpu_custom_call.1} parent=0
    _
  %s8 = ssub.s32 1, %s6
  %s9 = scalar_select 0, %s8, %s6
  $region1: #{tpu_custom_call.1} parent=0
    #allocation2 [shape = 'u8[4096]{0}', space=vmem, size = 0x1000, scoped, tag = 'output window, operand 0, single buffered']
    #allocation3 [shape = 's32[1]{0}', space=sflag, size = 0x4, scoped, tag = 'scoped memory for tpu_custom_call.1']
    %10 = vsyncpa [#allocation3], 0
    // Predicated region
    $region2: #{tpu_custom_call.1} parent=1 // pred_check
      _
    $region3: #{tpu_custom_call.1} parent=1 // pred_check_branch
      %12 = sbr.rel (0) target = $region5
    $region4: #{tpu_custom_call.1} parent=1 // pred_region
      _
    $region5: #{tpu_custom_call.1} parent=1 // pred_fallthru
      _
    // Predicated region
    $region6: #{tpu_custom_call.1} parent=1 // pred_check
      _
    $region7: #{tpu_custom_call.1} parent=1 // pred_check_branch
      %14 = sbr.rel (0) target = $region9
    $region8: #{tpu_custom_call.1} parent=1 // pred_region
      _
    $region9: #{tpu_custom_call.1} parent=1 // pred_fallthru
      _
    // Predicated region
    $region10: #{tpu_custom_call.1} parent=1 // pred_check
      _
    $region11: #{tpu_custom_call.1} parent=1 // pred_check_branch
      %16 = sbr.rel (0) target = $region13
    $region12: #{tpu_custom_call.1} parent=1 // pred_region
      _
    $region13: #{tpu_custom_call.1} parent=1 // pred_fallthru
      _
    // Predicated region
    $region14: #{tpu_custom_call.1} parent=1 // pred_check
      _
    $region15: #{tpu_custom_call.1} parent=1 // pred_check_branch
      %18 = sbr.rel (0) target = $region17
    $region16: #{tpu_custom_call.1} parent=1 // pred_region
      _
    $region17: #{tpu_custom_call.1} parent=1 // pred_fallthru
      _
    // Predicated region
    $region18: #{tpu_custom_call.1} parent=1 // pred_check
      _
    $region19: #{tpu_custom_call.1} parent=1 // pred_check_branch
      %20 = sbr.rel (0) target = $region21
    $region20: #{tpu_custom_call.1} parent=1 // pred_region
      _
    $region21: #{tpu_custom_call.1} parent=1 // pred_fallthru
      _
    %v21 = vld [vmem:[%s0] sm:$0xff]
    %v22 = vld [vmem:[%s1] sm:$0xff]
    %v23 = vld [vmem:[%s1 + $0x8] sm:$0xff]
    %v24 = vld [vmem:[%s2] sm:$0xff]
    %v25 = vld [vmem:[%s2 + $0x8] sm:$0xff]
    %27 = vset.pattern.permute.xlu0 0
    %28 = vperm.xlu0 %27, %v24
    %v29 = vpop.permute.xlu0 %28
    %32 = vset.pattern.permute.xlu0 0
    %33 = vperm.xlu0 %32, %v25
    %v34 = vpop.permute.xlu0 %33
    %vm36 = vcmask 39936
    %v38 = vsel %vm36, %v22, 0
    %v41 = vsel %vm36, %v23, 0
    %v44 = vsel %vm36, %v21, 0
    %46 = vmatprep.subr.mxu0 0.0
    %v47 = vand.u32 %v44, 4294901760
    %48 = vmatpush1.xpose.msra.mxu0 %v47
    %49 = vmatprep.subr.mxu0 0.0
    %50 = vmatpush1.xpose.msra.mxu0 0.0
    %51 = vmatprep.subr.mxu0 0.0
    %52 = vmatpush1.xpose.msra.mxu0 0.0
    %53 = vmatprep.subr.mxu0 0.0
    %54 = vmatpush1.xpose.msra.mxu0 0.0
    %55 = vmatprep.subr.mxu0 0.0
    %56 = vmatpush1.xpose.msra.mxu0 0.0
    %57 = vmatprep.subr.mxu0 0.0
    %58 = vmatpush1.xpose.msra.mxu0 0.0
    %59 = vmatprep.subr.mxu0 0.0
    %60 = vmatpush1.xpose.msra.mxu0 0.0
    %61 = vmatprep.subr.mxu0 0.0
    %62 = vmatpush1.xpose.msra.mxu0 0.0
    %63 = vmatprep.subr.mxu0 0.0
    %64 = vmatpush1.xpose.msra.mxu0 0.0
    %65 = vmatprep.subr.mxu0 0.0
    %66 = vmatpush1.xpose.msra.mxu0 0.0
    %67 = vmatprep.subr.mxu0 0.0
    %68 = vmatpush1.xpose.msra.mxu0 0.0
    %69 = vmatprep.subr.mxu0 0.0
    %70 = vmatpush1.xpose.msra.mxu0 0.0
    %71 = vmatprep.subr.mxu0 0.0
    %72 = vmatpush1.xpose.msra.mxu0 0.0
    %73 = vmatprep.subr.mxu0 0.0
    %74 = vmatpush1.xpose.msra.mxu0 0.0
    %75 = vmatprep.subr.mxu0 0.0
    %76 = vmatpush1.xpose.msra.mxu0 0.0
    %77 = vmatprep.subr.mxu0 0.0
    %78 = vmatpush1.xpose.msra.mxu0 0.0
    %79 = vmatprep.subr.mxu0 0.0
    %80 = vmatpush1.xpose.msra.mxu0 0.0
    %81 = vmatprep.subr.mxu0 0.0
    %82 = vmatpush1.xpose.msra.mxu0 0.0
    %83 = vmatprep.subr.mxu0 0.0
    %84 = vmatpush1.xpose.msra.mxu0 0.0
    %85 = vmatprep.subr.mxu0 0.0
    %86 = vmatpush1.xpose.msra.mxu0 0.0
    %87 = vmatprep.subr.mxu0 0.0
    %88 = vmatpush1.xpose.msra.mxu0 0.0
    %89 = vmatprep.subr.mxu0 0.0
    %90 = vmatpush1.xpose.msra.mxu0 0.0
    %91 = vmatprep.subr.mxu0 0.0
    %92 = vmatpush1.xpose.msra.mxu0 0.0
    %93 = vmatprep.subr.mxu0 0.0
    %94 = vmatpush1.xpose.msra.mxu0 0.0
    %95 = vmatprep.subr.mxu0 0.0
    %96 = vmatpush1.xpose.msra.mxu0 0.0
    %97 = vmatprep.subr.mxu0 0.0
    %98 = vmatpush1.xpose.msra.mxu0 0.0
    %99 = vmatprep.subr.mxu0 0.0
    %100 = vmatpush1.xpose.msra.mxu0 0.0
    %101 = vmatprep.subr.mxu0 0.0
    %102 = vmatpush1.xpose.msra.mxu0 0.0
    %103 = vmatprep.subr.mxu0 0.0
    %104 = vmatpush1.xpose.msra.mxu0 0.0
    %105 = vmatprep.subr.mxu0 0.0
    %106 = vmatpush1.xpose.msra.mxu0 0.0
    %107 = vmatprep.subr.mxu0 0.0
    %108 = vmatpush1.xpose.msra.mxu0 0.0
    %109 = vmatprep.subr.mxu0 0.0
    %110 = vmatpush1.xpose.msra.mxu0 0.0
    %111 = vmatprep.mubr.f32.mxu0 0.0
    %v112 = vand.u32 %v38, 4294901760
    %v113 = vsub.f32 %v38, %v112
    %v114 = vand.u32 %v113, 4294901760
    %v115 = vsub.f32 %v113, %v114
    %v116 = vand.u32 %v115, 4294901760
    %117 = vmatmul.mubr.f32.gmra.mrb[0].mxu0 %v116
    %v118 = vpop.f32.mrb[0].mxu0
    %v119 = vadd.f32 %v29, %v118
    %v120 = vpop.f32.mrb[0].mxu0
    %121 = vmatprep.mubr.f32.mxu0 0.0
    %v122 = vand.u32 %v41, 4294901760
    %v123 = vsub.f32 %v41, %v122
    %v124 = vand.u32 %v123, 4294901760
    %v125 = vsub.f32 %v123, %v124
    %v126 = vand.u32 %v125, 4294901760
    %127 = vmatmul.mubr.f32.gmra.mrb[0].mxu0 %v126
    %v128 = vpop.f32.mrb[0].mxu0
    %v129 = vadd.f32 %v34, %v128
    %v130 = vpop.f32.mrb[0].mxu0
    %131 = vdwg.mxu0
    %132 = vmatprep.subr.mxu0 0.0
    %v133 = vand.u32 %v44, 4294901760
    %v134 = vsub.f32 %v44, %v133
    %v135 = vand.u32 %v134, 4294901760
    %v136 = vsub.f32 %v134, %v135
    %v137 = vand.u32 %v136, 4294901760
    %138 = vmatpush1.xpose.msra.mxu0 %v137
    %139 = vmatprep.subr.mxu0 0.0
    %140 = vmatpush1.xpose.msra.mxu0 0.0
    %141 = vmatprep.subr.mxu0 0.0
    %142 = vmatpush1.xpose.msra.mxu0 0.0
    %143 = vmatprep.subr.mxu0 0.0
    %144 = vmatpush1.xpose.msra.mxu0 0.0
    %145 = vmatprep.subr.mxu0 0.0
    %146 = vmatpush1.xpose.msra.mxu0 0.0
    %147 = vmatprep.subr.mxu0 0.0
    %148 = vmatpush1.xpose.msra.mxu0 0.0
    %149 = vmatprep.subr.mxu0 0.0
    %150 = vmatpush1.xpose.msra.mxu0 0.0
    %151 = vmatprep.subr.mxu0 0.0
    %152 = vmatpush1.xpose.msra.mxu0 0.0
    %153 = vmatprep.subr.mxu0 0.0
    %154 = vmatpush1.xpose.msra.mxu0 0.0
    %155 = vmatprep.subr.mxu0 0.0
    %156 = vmatpush1.xpose.msra.mxu0 0.0
    %157 = vmatprep.subr.mxu0 0.0
    %158 = vmatpush1.xpose.msra.mxu0 0.0
    %159 = vmatprep.subr.mxu0 0.0
    %160 = vmatpush1.xpose.msra.mxu0 0.0
    %161 = vmatprep.subr.mxu0 0.0
    %162 = vmatpush1.xpose.msra.mxu0 0.0
    %163 = vmatprep.subr.mxu0 0.0
    %164 = vmatpush1.xpose.msra.mxu0 0.0
    %165 = vmatprep.subr.mxu0 0.0
    %166 = vmatpush1.xpose.msra.mxu0 0.0
    %167 = vmatprep.subr.mxu0 0.0
    %168 = vmatpush1.xpose.msra.mxu0 0.0
    %169 = vmatprep.subr.mxu0 0.0
    %170 = vmatpush1.xpose.msra.mxu0 0.0
    %171 = vmatprep.subr.mxu0 0.0
    %172 = vmatpush1.xpose.msra.mxu0 0.0
    %173 = vmatprep.subr.mxu0 0.0
    %174 = vmatpush1.xpose.msra.mxu0 0.0
    %175 = vmatprep.subr.mxu0 0.0
    %176 = vmatpush1.xpose.msra.mxu0 0.0
    %177 = vmatprep.subr.mxu0 0.0
    %178 = vmatpush1.xpose.msra.mxu0 0.0
    %179 = vmatprep.subr.mxu0 0.0
    %180 = vmatpush1.xpose.msra.mxu0 0.0
    %181 = vmatprep.subr.mxu0 0.0
    %182 = vmatpush1.xpose.msra.mxu0 0.0
    %183 = vmatprep.subr.mxu0 0.0
    %184 = vmatpush1.xpose.msra.mxu0 0.0
    %185 = vmatprep.subr.mxu0 0.0
    %186 = vmatpush1.xpose.msra.mxu0 0.0
    %187 = vmatprep.subr.mxu0 0.0
    %188 = vmatpush1.xpose.msra.mxu0 0.0
    %189 = vmatprep.subr.mxu0 0.0
    %190 = vmatpush1.xpose.msra.mxu0 0.0
    %191 = vmatprep.subr.mxu0 0.0
    %192 = vmatpush1.xpose.msra.mxu0 0.0
    %193 = vmatprep.subr.mxu0 0.0
    %194 = vmatpush1.xpose.msra.mxu0 0.0
    %195 = vmatprep.subr.mxu0 0.0
    %196 = vmatpush1.xpose.msra.mxu0 0.0
    %197 = vmatprep.subr.mxu0 0.0
    %198 = vmatpush1.xpose.msra.mxu0 0.0
    %199 = vmatprep.subr.mxu0 0.0
    %200 = vmatpush1.xpose.msra.mxu0 0.0
    %201 = vmatprep.mubr.f32.mxu0 0.0
    %v202 = vand.u32 %v38, 4294901760
    %203 = vmatmul.mubr.f32.gmra.mrb[0].mxu0 %v202
    %v204 = vpop.f32.mrb[0].mxu0
    %v205 = vadd.f32 %v119, %v204
    %v206 = vpop.f32.mrb[0].mxu0
    %207 = vmatprep.mubr.f32.mxu0 0.0
    %v208 = vand.u32 %v41, 4294901760
    %209 = vmatmul.mubr.f32.gmra.mrb[0].mxu0 %v208
    %v210 = vpop.f32.mrb[0].mxu0
    %v211 = vadd.f32 %v129, %v210
    %v212 = vpop.f32.mrb[0].mxu0
    %213 = vdwg.mxu0
    %214 = vmatprep.subr.mxu0 0.0
    %v215 = vand.u32 %v44, 4294901760
    %v216 = vsub.f32 %v44, %v215
    %217 = vmatpush1.xpose.msra.mxu0 %v216
    %218 = vmatprep.subr.mxu0 0.0
    %219 = vmatpush1.xpose.msra.mxu0 0.0
    %220 = vmatprep.subr.mxu0 0.0
    %221 = vmatpush1.xpose.msra.mxu0 0.0
    %222 = vmatprep.subr.mxu0 0.0
    %223 = vmatpush1.xpose.msra.mxu0 0.0
    %224 = vmatprep.subr.mxu0 0.0
    %225 = vmatpush1.xpose.msra.mxu0 0.0
    %226 = vmatprep.subr.mxu0 0.0
    %227 = vmatpush1.xpose.msra.mxu0 0.0
    %228 = vmatprep.subr.mxu0 0.0
    %229 = vmatpush1.xpose.msra.mxu0 0.0
    %230 = vmatprep.subr.mxu0 0.0
    %231 = vmatpush1.xpose.msra.mxu0 0.0
    %232 = vmatprep.subr.mxu0 0.0
    %233 = vmatpush1.xpose.msra.mxu0 0.0
    %234 = vmatprep.subr.mxu0 0.0
    %235 = vmatpush1.xpose.msra.mxu0 0.0
    %236 = vmatprep.subr.mxu0 0.0
    %237 = vmatpush1.xpose.msra.mxu0 0.0
    %238 = vmatprep.subr.mxu0 0.0
    %239 = vmatpush1.xpose.msra.mxu0 0.0
    %240 = vmatprep.subr.mxu0 0.0
    %241 = vmatpush1.xpose.msra.mxu0 0.0
    %242 = vmatprep.subr.mxu0 0.0
    %243 = vmatpush1.xpose.msra.mxu0 0.0
    %244 = vmatprep.subr.mxu0 0.0
    %245 = vmatpush1.xpose.msra.mxu0 0.0
    %246 = vmatprep.subr.mxu0 0.0
    %247 = vmatpush1.xpose.msra.mxu0 0.0
    %248 = vmatprep.subr.mxu0 0.0
    %249 = vmatpush1.xpose.msra.mxu0 0.0
    %250 = vmatprep.subr.mxu0 0.0
    %251 = vmatpush1.xpose.msra.mxu0 0.0
    %252 = vmatprep.subr.mxu0 0.0
    %253 = vmatpush1.xpose.msra.mxu0 0.0
    %254 = vmatprep.subr.mxu0 0.0
    %255 = vmatpush1.xpose.msra.mxu0 0.0
    %256 = vmatprep.subr.mxu0 0.0
    %257 = vmatpush1.xpose.msra.mxu0 0.0
    %258 = vmatprep.subr.mxu0 0.0
    %259 = vmatpush1.xpose.msra.mxu0 0.0
    %260 = vmatprep.subr.mxu0 0.0
    %261 = vmatpush1.xpose.msra.mxu0 0.0
    %262 = vmatprep.subr.mxu0 0.0
    %263 = vmatpush1.xpose.msra.mxu0 0.0
    %264 = vmatprep.subr.mxu0 0.0
    %265 = vmatpush1.xpose.msra.mxu0 0.0
    %266 = vmatprep.subr.mxu0 0.0
    %267 = vmatpush1.xpose.msra.mxu0 0.0
    %268 = vmatprep.subr.mxu0 0.0
    %269 = vmatpush1.xpose.msra.mxu0 0.0
    %270 = vmatprep.subr.mxu0 0.0
    %271 = vmatpush1.xpose.msra.mxu0 0.0
    %272 = vmatprep.subr.mxu0 0.0
    %273 = vmatpush1.xpose.msra.mxu0 0.0
    %274 = vmatprep.subr.mxu0 0.0
    %275 = vmatpush1.xpose.msra.mxu0 0.0
    %276 = vmatprep.subr.mxu0 0.0
    %277 = vmatpush1.xpose.msra.mxu0 0.0
    %278 = vmatprep.subr.mxu0 0.0
    %279 = vmatpush1.xpose.msra.mxu0 0.0
    %280 = vmatprep.mubr.f32.mxu0 0.0
    %v281 = vand.u32 %v38, 4294901760
    %v282 = vsub.f32 %v38, %v281
    %283 = vmatmul.mubr.f32.gmra.mrb[0].mxu0 %v282
    %v284 = vpop.f32.mrb[0].mxu0
    %v285 = vadd.f32 %v205, %v284
    %v286 = vpop.f32.mrb[0].mxu0
    %287 = vmatprep.mubr.f32.mxu0 0.0
    %v288 = vand.u32 %v41, 4294901760
    %v289 = vsub.f32 %v41, %v288
    %290 = vmatmul.mubr.f32.gmra.mrb[0].mxu0 %v289
    %v291 = vpop.f32.mrb[0].mxu0
    %v292 = vadd.f32 %v211, %v291
    %v293 = vpop.f32.mrb[0].mxu0
    %294 = vdwg.mxu0
    %295 = vmatprep.subr.mxu0 0.0
    %v296 = vand.u32 %v44, 4294901760
    %297 = vmatpush1.xpose.msra.mxu0 %v296
    %298 = vmatprep.subr.mxu0 0.0
    %299 = vmatpush1.xpose.msra.mxu0 0.0
    %300 = vmatprep.subr.mxu0 0.0
    %301 = vmatpush1.xpose.msra.mxu0 0.0
    %302 = vmatprep.subr.mxu0 0.0
    %303 = vmatpush1.xpose.msra.mxu0 0.0
    %304 = vmatprep.subr.mxu0 0.0
    %305 = vmatpush1.xpose.msra.mxu0 0.0
    %306 = vmatprep.subr.mxu0 0.0
    %307 = vmatpush1.xpose.msra.mxu0 0.0
    %308 = vmatprep.subr.mxu0 0.0
    %309 = vmatpush1.xpose.msra.mxu0 0.0
    %310 = vmatprep.subr.mxu0 0.0
    %311 = vmatpush1.xpose.msra.mxu0 0.0
    %312 = vmatprep.subr.mxu0 0.0
    %313 = vmatpush1.xpose.msra.mxu0 0.0
    %314 = vmatprep.subr.mxu0 0.0
    %315 = vmatpush1.xpose.msra.mxu0 0.0
    %316 = vmatprep.subr.mxu0 0.0
    %317 = vmatpush1.xpose.msra.mxu0 0.0
    %318 = vmatprep.subr.mxu0 0.0
    %319 = vmatpush1.xpose.msra.mxu0 0.0
    %320 = vmatprep.subr.mxu0 0.0
    %321 = vmatpush1.xpose.msra.mxu0 0.0
    %322 = vmatprep.subr.mxu0 0.0
    %323 = vmatpush1.xpose.msra.mxu0 0.0
    %324 = vmatprep.subr.mxu0 0.0
    %325 = vmatpush1.xpose.msra.mxu0 0.0
    %326 = vmatprep.subr.mxu0 0.0
    %327 = vmatpush1.xpose.msra.mxu0 0.0
    %328 = vmatprep.subr.mxu0 0.0
    %329 = vmatpush1.xpose.msra.mxu0 0.0
    %330 = vmatprep.subr.mxu0 0.0
    %331 = vmatpush1.xpose.msra.mxu0 0.0
    %332 = vmatprep.subr.mxu0 0.0
    %333 = vmatpush1.xpose.msra.mxu0 0.0
    %334 = vmatprep.subr.mxu0 0.0
    %335 = vmatpush1.xpose.msra.mxu0 0.0
    %336 = vmatprep.subr.mxu0 0.0
    %337 = vmatpush1.xpose.msra.mxu0 0.0
    %338 = vmatprep.subr.mxu0 0.0
    %339 = vmatpush1.xpose.msra.mxu0 0.0
    %340 = vmatprep.subr.mxu0 0.0
    %341 = vmatpush1.xpose.msra.mxu0 0.0
    %342 = vmatprep.subr.mxu0 0.0
    %343 = vmatpush1.xpose.msra.mxu0 0.0
    %344 = vmatprep.subr.mxu0 0.0
    %345 = vmatpush1.xpose.msra.mxu0 0.0
    %346 = vmatprep.subr.mxu0 0.0
    %347 = vmatpush1.xpose.msra.mxu0 0.0
    %348 = vmatprep.subr.mxu0 0.0
    %349 = vmatpush1.xpose.msra.mxu0 0.0
    %350 = vmatprep.subr.mxu0 0.0
    %351 = vmatpush1.xpose.msra.mxu0 0.0
    %352 = vmatprep.subr.mxu0 0.0
    %353 = vmatpush1.xpose.msra.mxu0 0.0
    %354 = vmatprep.subr.mxu0 0.0
    %355 = vmatpush1.xpose.msra.mxu0 0.0
    %356 = vmatprep.subr.mxu0 0.0
    %357 = vmatpush1.xpose.msra.mxu0 0.0
    %358 = vmatprep.subr.mxu0 0.0
    %359 = vmatpush1.xpose.msra.mxu0 0.0
    %360 = vmatprep.mubr.f32.mxu0 0.0
    %v361 = vand.u32 %v38, 4294901760
    %v362 = vsub.f32 %v38, %v361
    %v363 = vand.u32 %v362, 4294901760
    %364 = vmatmul.mubr.f32.gmra.mrb[0].mxu0 %v363
    %v365 = vpop.f32.mrb[0].mxu0
    %v366 = vadd.f32 %v285, %v365
    %v367 = vpop.f32.mrb[0].mxu0
    %368 = vmatprep.mubr.f32.mxu0 0.0
    %v369 = vand.u32 %v41, 4294901760
    %v370 = vsub.f32 %v41, %v369
    %v371 = vand.u32 %v370, 4294901760
    %372 = vmatmul.mubr.f32.gmra.mrb[0].mxu0 %v371
    %v373 = vpop.f32.mrb[0].mxu0
    %v374 = vadd.f32 %v292, %v373
    %v375 = vpop.f32.mrb[0].mxu0
    %376 = vdwg.mxu0
    %377 = vmatprep.subr.mxu0 0.0
    %v378 = vand.u32 %v44, 4294901760
    %v379 = vsub.f32 %v44, %v378
    %v380 = vand.u32 %v379, 4294901760
    %381 = vmatpush1.xpose.msra.mxu0 %v380
    %382 = vmatprep.subr.mxu0 0.0
    %383 = vmatpush1.xpose.msra.mxu0 0.0
    %384 = vmatprep.subr.mxu0 0.0
    %385 = vmatpush1.xpose.msra.mxu0 0.0
    %386 = vmatprep.subr.mxu0 0.0
    %387 = vmatpush1.xpose.msra.mxu0 0.0
    %388 = vmatprep.subr.mxu0 0.0
    %389 = vmatpush1.xpose.msra.mxu0 0.0
    %390 = vmatprep.subr.mxu0 0.0
    %391 = vmatpush1.xpose.msra.mxu0 0.0
    %392 = vmatprep.subr.mxu0 0.0
    %393 = vmatpush1.xpose.msra.mxu0 0.0
    %394 = vmatprep.subr.mxu0 0.0
    %395 = vmatpush1.xpose.msra.mxu0 0.0
    %396 = vmatprep.subr.mxu0 0.0
    %397 = vmatpush1.xpose.msra.mxu0 0.0
    %398 = vmatprep.subr.mxu0 0.0
    %399 = vmatpush1.xpose.msra.mxu0 0.0
    %400 = vmatprep.subr.mxu0 0.0
    %401 = vmatpush1.xpose.msra.mxu0 0.0
    %402 = vmatprep.subr.mxu0 0.0
    %403 = vmatpush1.xpose.msra.mxu0 0.0
    %404 = vmatprep.subr.mxu0 0.0
    %405 = vmatpush1.xpose.msra.mxu0 0.0
    %406 = vmatprep.subr.mxu0 0.0
    %407 = vmatpush1.xpose.msra.mxu0 0.0
    %408 = vmatprep.subr.mxu0 0.0
    %409 = vmatpush1.xpose.msra.mxu0 0.0
    %410 = vmatprep.subr.mxu0 0.0
    %411 = vmatpush1.xpose.msra.mxu0 0.0
    %412 = vmatprep.subr.mxu0 0.0
    %413 = vmatpush1.xpose.msra.mxu0 0.0
    %414 = vmatprep.subr.mxu0 0.0
    %415 = vmatpush1.xpose.msra.mxu0 0.0
    %416 = vmatprep.subr.mxu0 0.0
    %417 = vmatpush1.xpose.msra.mxu0 0.0
    %418 = vmatprep.subr.mxu0 0.0
    %419 = vmatpush1.xpose.msra.mxu0 0.0
    %420 = vmatprep.subr.mxu0 0.0
    %421 = vmatpush1.xpose.msra.mxu0 0.0
    %422 = vmatprep.subr.mxu0 0.0
    %423 = vmatpush1.xpose.msra.mxu0 0.0
    %424 = vmatprep.subr.mxu0 0.0
    %425 = vmatpush1.xpose.msra.mxu0 0.0
    %426 = vmatprep.subr.mxu0 0.0
    %427 = vmatpush1.xpose.msra.mxu0 0.0
    %428 = vmatprep.subr.mxu0 0.0
    %429 = vmatpush1.xpose.msra.mxu0 0.0
    %430 = vmatprep.subr.mxu0 0.0
    %431 = vmatpush1.xpose.msra.mxu0 0.0
    %432 = vmatprep.subr.mxu0 0.0
    %433 = vmatpush1.xpose.msra.mxu0 0.0
    %434 = vmatprep.subr.mxu0 0.0
    %435 = vmatpush1.xpose.msra.mxu0 0.0
    %436 = vmatprep.subr.mxu0 0.0
    %437 = vmatpush1.xpose.msra.mxu0 0.0
    %438 = vmatprep.subr.mxu0 0.0
    %439 = vmatpush1.xpose.msra.mxu0 0.0
    %440 = vmatprep.subr.mxu0 0.0
    %441 = vmatpush1.xpose.msra.mxu0 0.0
    %442 = vmatprep.subr.mxu0 0.0
    %443 = vmatpush1.xpose.msra.mxu0 0.0
    %444 = vmatprep.mubr.f32.mxu0 0.0
    %v445 = vand.u32 %v38, 4294901760
    %446 = vmatmul.mubr.f32.gmra.mrb[0].mxu0 %v445
    %v447 = vpop.f32.mrb[0].mxu0
    %v448 = vadd.f32 %v366, %v447
    %v449 = vpop.f32.mrb[0].mxu0
    %450 = vmatprep.mubr.f32.mxu0 0.0
    %v451 = vand.u32 %v41, 4294901760
    %452 = vmatmul.mubr.f32.gmra.mrb[0].mxu0 %v451
    %v453 = vpop.f32.mrb[0].mxu0
    %v454 = vadd.f32 %v374, %v453
    %v455 = vpop.f32.mrb[0].mxu0
    %456 = vdwg.mxu0
    %457 = vmatprep.subr.mxu0 0.0
    %v458 = vand.u32 %v44, 4294901760
    %459 = vmatpush1.xpose.msra.mxu0 %v458
    %460 = vmatprep.subr.mxu0 0.0
    %461 = vmatpush1.xpose.msra.mxu0 0.0
    %462 = vmatprep.subr.mxu0 0.0
    %463 = vmatpush1.xpose.msra.mxu0 0.0
    %464 = vmatprep.subr.mxu0 0.0
    %465 = vmatpush1.xpose.msra.mxu0 0.0
    %466 = vmatprep.subr.mxu0 0.0
    %467 = vmatpush1.xpose.msra.mxu0 0.0
    %468 = vmatprep.subr.mxu0 0.0
    %469 = vmatpush1.xpose.msra.mxu0 0.0
    %470 = vmatprep.subr.mxu0 0.0
    %471 = vmatpush1.xpose.msra.mxu0 0.0
    %472 = vmatprep.subr.mxu0 0.0
    %473 = vmatpush1.xpose.msra.mxu0 0.0
    %474 = vmatprep.subr.mxu0 0.0
    %475 = vmatpush1.xpose.msra.mxu0 0.0
    %476 = vmatprep.subr.mxu0 0.0
    %477 = vmatpush1.xpose.msra.mxu0 0.0
    %478 = vmatprep.subr.mxu0 0.0
    %479 = vmatpush1.xpose.msra.mxu0 0.0
    %480 = vmatprep.subr.mxu0 0.0
    %481 = vmatpush1.xpose.msra.mxu0 0.0
    %482 = vmatprep.subr.mxu0 0.0
    %483 = vmatpush1.xpose.msra.mxu0 0.0
    %484 = vmatprep.subr.mxu0 0.0
    %485 = vmatpush1.xpose.msra.mxu0 0.0
    %486 = vmatprep.subr.mxu0 0.0
    %487 = vmatpush1.xpose.msra.mxu0 0.0
    %488 = vmatprep.subr.mxu0 0.0
    %489 = vmatpush1.xpose.msra.mxu0 0.0
    %490 = vmatprep.subr.mxu0 0.0
    %491 = vmatpush1.xpose.msra.mxu0 0.0
    %492 = vmatprep.subr.mxu0 0.0
    %493 = vmatpush1.xpose.msra.mxu0 0.0
    %494 = vmatprep.subr.mxu0 0.0
    %495 = vmatpush1.xpose.msra.mxu0 0.0
    %496 = vmatprep.subr.mxu0 0.0
    %497 = vmatpush1.xpose.msra.mxu0 0.0
    %498 = vmatprep.subr.mxu0 0.0
    %499 = vmatpush1.xpose.msra.mxu0 0.0
    %500 = vmatprep.subr.mxu0 0.0
    %501 = vmatpush1.xpose.msra.mxu0 0.0
    %502 = vmatprep.subr.mxu0 0.0
    %503 = vmatpush1.xpose.msra.mxu0 0.0
    %504 = vmatprep.subr.mxu0 0.0
    %505 = vmatpush1.xpose.msra.mxu0 0.0
    %506 = vmatprep.subr.mxu0 0.0
    %507 = vmatpush1.xpose.msra.mxu0 0.0
    %508 = vmatprep.subr.mxu0 0.0
    %509 = vmatpush1.xpose.msra.mxu0 0.0
    %510 = vmatprep.subr.mxu0 0.0
    %511 = vmatpush1.xpose.msra.mxu0 0.0
    %512 = vmatprep.subr.mxu0 0.0
    %513 = vmatpush1.xpose.msra.mxu0 0.0
    %514 = vmatprep.subr.mxu0 0.0
    %515 = vmatpush1.xpose.msra.mxu0 0.0
    %516 = vmatprep.subr.mxu0 0.0
    %517 = vmatpush1.xpose.msra.mxu0 0.0
    %518 = vmatprep.subr.mxu0 0.0
    %519 = vmatpush1.xpose.msra.mxu0 0.0
    %520 = vmatprep.subr.mxu0 0.0
    %521 = vmatpush1.xpose.msra.mxu0 0.0
    %522 = vmatprep.mubr.f32.mxu0 0.0
    %v523 = vand.u32 %v38, 4294901760
    %524 = vmatmul.mubr.f32.gmra.mrb[0].mxu0 %v523
    %v525 = vpop.f32.mrb[0].mxu0
    %v526 = vadd.f32 %v448, %v525
    %v527 = vpop.f32.mrb[0].mxu0
    %528 = vmatprep.mubr.f32.mxu0 0.0
    %v529 = vand.u32 %v41, 4294901760
    %530 = vmatmul.mubr.f32.gmra.mrb[0].mxu0 %v529
    %v531 = vpop.f32.mrb[0].mxu0
    %v532 = vadd.f32 %v454, %v531
    %v533 = vpop.f32.mrb[0].mxu0
    %534 = vdwg.mxu0
    %v535 = vmax.f32 %v526, 0.0
    %v536 = vmax.f32 %v532, 0.0
    %v537 = vld [vmem:[%s3] sm:$0x1f]
    %v538 = vld [vmem:[%s4] sm:$0x1f]
    %540 = vset.pattern.permute.xlu0 0
    %541 = vperm.xlu0 %540, %v538
    %v542 = vpop.permute.xlu0 %541
    %vm544 = vcmask 130048
    %v546 = vsel %vm544, %v537, 0
    %548 = vmatprep.subr.mxu0 0.0
    %v549 = vand.u32 %v535, 4294901760
    %550 = vmatpush1.msra.mxu0 %v549
    %551 = vmatprep.subr.mxu0 0.0
    %v552 = vand.u32 %v536, 4294901760
    %553 = vmatpush1.msra.mxu0 %v552
    %554 = vmatprep.subr.mxu0 0.0
    %555 = vmatpush1.msra.mxu0 0.0
    %556 = vmatprep.subr.mxu0 0.0
    %557 = vmatpush1.msra.mxu0 0.0
    %558 = vmatprep.subr.mxu0 0.0
    %559 = vmatpush1.msra.mxu0 0.0
    %560 = vmatprep.subr.mxu0 0.0
    %561 = vmatpush1.msra.mxu0 0.0
    %562 = vmatprep.subr.mxu0 0.0
    %563 = vmatpush1.msra.mxu0 0.0
    %564 = vmatprep.subr.mxu0 0.0
    %565 = vmatpush1.msra.mxu0 0.0
    %566 = vmatprep.subr.mxu0 0.0
    %567 = vmatpush1.msra.mxu0 0.0
    %568 = vmatprep.subr.mxu0 0.0
    %569 = vmatpush1.msra.mxu0 0.0
    %570 = vmatprep.subr.mxu0 0.0
    %571 = vmatpush1.msra.mxu0 0.0
    %572 = vmatprep.subr.mxu0 0.0
    %573 = vmatpush1.msra.mxu0 0.0
    %574 = vmatprep.subr.mxu0 0.0
    %575 = vmatpush1.msra.mxu0 0.0
    %576 = vmatprep.subr.mxu0 0.0
    %577 = vmatpush1.msra.mxu0 0.0
    %578 = vmatprep.subr.mxu0 0.0
    %579 = vmatpush1.msra.mxu0 0.0
    %580 = vmatprep.subr.mxu0 0.0
    %581 = vmatpush1.msra.mxu0 0.0
    %582 = vmatprep.subr.mxu0 0.0
    %583 = vmatpush1.msra.mxu0 0.0
    %584 = vmatprep.subr.mxu0 0.0
    %585 = vmatpush1.msra.mxu0 0.0
    %586 = vmatprep.subr.mxu0 0.0
    %587 = vmatpush1.msra.mxu0 0.0
    %588 = vmatprep.subr.mxu0 0.0
    %589 = vmatpush1.msra.mxu0 0.0
    %590 = vmatprep.subr.mxu0 0.0
    %591 = vmatpush1.msra.mxu0 0.0
    %592 = vmatprep.subr.mxu0 0.0
    %593 = vmatpush1.msra.mxu0 0.0
    %594 = vmatprep.subr.mxu0 0.0
    %595 = vmatpush1.msra.mxu0 0.0
    %596 = vmatprep.subr.mxu0 0.0
    %597 = vmatpush1.msra.mxu0 0.0
    %598 = vmatprep.subr.mxu0 0.0
    %599 = vmatpush1.msra.mxu0 0.0
    %600 = vmatprep.subr.mxu0 0.0
    %601 = vmatpush1.msra.mxu0 0.0
    %602 = vmatprep.subr.mxu0 0.0
    %603 = vmatpush1.msra.mxu0 0.0
    %604 = vmatprep.subr.mxu0 0.0
    %605 = vmatpush1.msra.mxu0 0.0
    %606 = vmatprep.subr.mxu0 0.0
    %607 = vmatpush1.msra.mxu0 0.0
    %608 = vmatprep.subr.mxu0 0.0
    %609 = vmatpush1.msra.mxu0 0.0
    %610 = vmatprep.subr.mxu0 0.0
    %611 = vmatpush1.msra.mxu0 0.0
    %612 = vmatprep.subr.mxu0 0.0
    %613 = vmatpush1.msra.mxu0 0.0
    %614 = vmatprep.mubr.f32.mxu0 0.0
    %v615 = vand.u32 %v546, 4294901760
    %v616 = vsub.f32 %v546, %v615
    %v617 = vand.u32 %v616, 4294901760
    %v618 = vsub.f32 %v616, %v617
    %v619 = vand.u32 %v618, 4294901760
    %620 = vmatmul.mubr.f32.gmra.mrb[0].mxu0 %v619
    %v621 = vpop.f32.mrb[0].mxu0
    %v622 = vadd.f32 %v542, %v621
    %v623 = vpop.f32.mrb[0].mxu0
    %624 = vdwg.mxu0
    %625 = vmatprep.subr.mxu0 0.0
    %v626 = vand.u32 %v535, 4294901760
    %v627 = vsub.f32 %v535, %v626
    %v628 = vand.u32 %v627, 4294901760
    %v629 = vsub.f32 %v627, %v628
    %v630 = vand.u32 %v629, 4294901760
    %631 = vmatpush1.msra.mxu0 %v630
    %632 = vmatprep.subr.mxu0 0.0
    %v633 = vand.u32 %v536, 4294901760
    %v634 = vsub.f32 %v536, %v633
    %v635 = vand.u32 %v634, 4294901760
    %v636 = vsub.f32 %v634, %v635
    %v637 = vand.u32 %v636, 4294901760
    %638 = vmatpush1.msra.mxu0 %v637
    %639 = vmatprep.subr.mxu0 0.0
    %640 = vmatpush1.msra.mxu0 0.0
    %641 = vmatprep.subr.mxu0 0.0
    %642 = vmatpush1.msra.mxu0 0.0
    %643 = vmatprep.subr.mxu0 0.0
    %644 = vmatpush1.msra.mxu0 0.0
    %645 = vmatprep.subr.mxu0 0.0
    %646 = vmatpush1.msra.mxu0 0.0
    %647 = vmatprep.subr.mxu0 0.0
    %648 = vmatpush1.msra.mxu0 0.0
    %649 = vmatprep.subr.mxu0 0.0
    %650 = vmatpush1.msra.mxu0 0.0
    %651 = vmatprep.subr.mxu0 0.0
    %652 = vmatpush1.msra.mxu0 0.0
    %653 = vmatprep.subr.mxu0 0.0
    %654 = vmatpush1.msra.mxu0 0.0
    %655 = vmatprep.subr.mxu0 0.0
    %656 = vmatpush1.msra.mxu0 0.0
    %657 = vmatprep.subr.mxu0 0.0
    %658 = vmatpush1.msra.mxu0 0.0
    %659 = vmatprep.subr.mxu0 0.0
    %660 = vmatpush1.msra.mxu0 0.0
    %661 = vmatprep.subr.mxu0 0.0
    %662 = vmatpush1.msra.mxu0 0.0
    %663 = vmatprep.subr.mxu0 0.0
    %664 = vmatpush1.msra.mxu0 0.0
    %665 = vmatprep.subr.mxu0 0.0
    %666 = vmatpush1.msra.mxu0 0.0
    %667 = vmatprep.subr.mxu0 0.0
    %668 = vmatpush1.msra.mxu0 0.0
    %669 = vmatprep.subr.mxu0 0.0
    %670 = vmatpush1.msra.mxu0 0.0
    %671 = vmatprep.subr.mxu0 0.0
    %672 = vmatpush1.msra.mxu0 0.0
    %673 = vmatprep.subr.mxu0 0.0
    %674 = vmatpush1.msra.mxu0 0.0
    %675 = vmatprep.subr.mxu0 0.0
    %676 = vmatpush1.msra.mxu0 0.0
    %677 = vmatprep.subr.mxu0 0.0
    %678 = vmatpush1.msra.mxu0 0.0
    %679 = vmatprep.subr.mxu0 0.0
    %680 = vmatpush1.msra.mxu0 0.0
    %681 = vmatprep.subr.mxu0 0.0
    %682 = vmatpush1.msra.mxu0 0.0
    %683 = vmatprep.subr.mxu0 0.0
    %684 = vmatpush1.msra.mxu0 0.0
    %685 = vmatprep.subr.mxu0 0.0
    %686 = vmatpush1.msra.mxu0 0.0
    %687 = vmatprep.subr.mxu0 0.0
    %688 = vmatpush1.msra.mxu0 0.0
    %689 = vmatprep.subr.mxu0 0.0
    %690 = vmatpush1.msra.mxu0 0.0
    %691 = vmatprep.subr.mxu0 0.0
    %692 = vmatpush1.msra.mxu0 0.0
    %693 = vmatprep.subr.mxu0 0.0
    %694 = vmatpush1.msra.mxu0 0.0
    %695 = vmatprep.subr.mxu0 0.0
    %696 = vmatpush1.msra.mxu0 0.0
    %697 = vmatprep.subr.mxu0 0.0
    %698 = vmatpush1.msra.mxu0 0.0
    %699 = vmatprep.mubr.f32.mxu0 0.0
    %v700 = vand.u32 %v546, 4294901760
    %701 = vmatmul.mubr.f32.gmra.mrb[0].mxu0 %v700
    %v702 = vpop.f32.mrb[0].mxu0
    %v703 = vadd.f32 %v622, %v702
    %v704 = vpop.f32.mrb[0].mxu0
    %705 = vdwg.mxu0
    %706 = vmatprep.subr.mxu0 0.0
    %v707 = vand.u32 %v535, 4294901760
    %v708 = vsub.f32 %v535, %v707
    %709 = vmatpush1.msra.mxu0 %v708
    %710 = vmatprep.subr.mxu0 0.0
    %v711 = vand.u32 %v536, 4294901760
    %v712 = vsub.f32 %v536, %v711
    %713 = vmatpush1.msra.mxu0 %v712
    %714 = vmatprep.subr.mxu0 0.0
    %715 = vmatpush1.msra.mxu0 0.0
    %716 = vmatprep.subr.mxu0 0.0
    %717 = vmatpush1.msra.mxu0 0.0
    %718 = vmatprep.subr.mxu0 0.0
    %719 = vmatpush1.msra.mxu0 0.0
    %720 = vmatprep.subr.mxu0 0.0
    %721 = vmatpush1.msra.mxu0 0.0
    %722 = vmatprep.subr.mxu0 0.0
    %723 = vmatpush1.msra.mxu0 0.0
    %724 = vmatprep.subr.mxu0 0.0
    %725 = vmatpush1.msra.mxu0 0.0
    %726 = vmatprep.subr.mxu0 0.0
    %727 = vmatpush1.msra.mxu0 0.0
    %728 = vmatprep.subr.mxu0 0.0
    %729 = vmatpush1.msra.mxu0 0.0
    %730 = vmatprep.subr.mxu0 0.0
    %731 = vmatpush1.msra.mxu0 0.0
    %732 = vmatprep.subr.mxu0 0.0
    %733 = vmatpush1.msra.mxu0 0.0
    %734 = vmatprep.subr.mxu0 0.0
    %735 = vmatpush1.msra.mxu0 0.0
    %736 = vmatprep.subr.mxu0 0.0
    %737 = vmatpush1.msra.mxu0 0.0
    %738 = vmatprep.subr.mxu0 0.0
    %739 = vmatpush1.msra.mxu0 0.0
    %740 = vmatprep.subr.mxu0 0.0
    %741 = vmatpush1.msra.mxu0 0.0
    %742 = vmatprep.subr.mxu0 0.0
    %743 = vmatpush1.msra.mxu0 0.0
    %744 = vmatprep.subr.mxu0 0.0
    %745 = vmatpush1.msra.mxu0 0.0
    %746 = vmatprep.subr.mxu0 0.0
    %747 = vmatpush1.msra.mxu0 0.0
    %748 = vmatprep.subr.mxu0 0.0
    %749 = vmatpush1.msra.mxu0 0.0
    %750 = vmatprep.subr.mxu0 0.0
    %751 = vmatpush1.msra.mxu0 0.0
    %752 = vmatprep.subr.mxu0 0.0
    %753 = vmatpush1.msra.mxu0 0.0
    %754 = vmatprep.subr.mxu0 0.0
    %755 = vmatpush1.msra.mxu0 0.0
    %756 = vmatprep.subr.mxu0 0.0
    %757 = vmatpush1.msra.mxu0 0.0
    %758 = vmatprep.subr.mxu0 0.0
    %759 = vmatpush1.msra.mxu0 0.0
    %760 = vmatprep.subr.mxu0 0.0
    %761 = vmatpush1.msra.mxu0 0.0
    %762 = vmatprep.subr.mxu0 0.0
    %763 = vmatpush1.msra.mxu0 0.0
    %764 = vmatprep.subr.mxu0 0.0
    %765 = vmatpush1.msra.mxu0 0.0
    %766 = vmatprep.subr.mxu0 0.0
    %767 = vmatpush1.msra.mxu0 0.0
    %768 = vmatprep.subr.mxu0 0.0
    %769 = vmatpush1.msra.mxu0 0.0
    %770 = vmatprep.subr.mxu0 0.0
    %771 = vmatpush1.msra.mxu0 0.0
    %772 = vmatprep.subr.mxu0 0.0
    %773 = vmatpush1.msra.mxu0 0.0
    %774 = vmatprep.mubr.f32.mxu0 0.0
    %v775 = vand.u32 %v546, 4294901760
    %v776 = vsub.f32 %v546, %v775
    %777 = vmatmul.mubr.f32.gmra.mrb[0].mxu0 %v776
    %v778 = vpop.f32.mrb[0].mxu0
    %v779 = vadd.f32 %v703, %v778
    %v780 = vpop.f32.mrb[0].mxu0
    %781 = vdwg.mxu0
    %782 = vmatprep.subr.mxu0 0.0
    %v783 = vand.u32 %v535, 4294901760
    %784 = vmatpush1.msra.mxu0 %v783
    %785 = vmatprep.subr.mxu0 0.0
    %v786 = vand.u32 %v536, 4294901760
    %787 = vmatpush1.msra.mxu0 %v786
    %788 = vmatprep.subr.mxu0 0.0
    %789 = vmatpush1.msra.mxu0 0.0
    %790 = vmatprep.subr.mxu0 0.0
    %791 = vmatpush1.msra.mxu0 0.0
    %792 = vmatprep.subr.mxu0 0.0
    %793 = vmatpush1.msra.mxu0 0.0
    %794 = vmatprep.subr.mxu0 0.0
    %795 = vmatpush1.msra.mxu0 0.0
    %796 = vmatprep.subr.mxu0 0.0
    %797 = vmatpush1.msra.mxu0 0.0
    %798 = vmatprep.subr.mxu0 0.0
    %799 = vmatpush1.msra.mxu0 0.0
    %800 = vmatprep.subr.mxu0 0.0
    %801 = vmatpush1.msra.mxu0 0.0
    %802 = vmatprep.subr.mxu0 0.0
    %803 = vmatpush1.msra.mxu0 0.0
    %804 = vmatprep.subr.mxu0 0.0
    %805 = vmatpush1.msra.mxu0 0.0
    %806 = vmatprep.subr.mxu0 0.0
    %807 = vmatpush1.msra.mxu0 0.0
    %808 = vmatprep.subr.mxu0 0.0
    %809 = vmatpush1.msra.mxu0 0.0
    %810 = vmatprep.subr.mxu0 0.0
    %811 = vmatpush1.msra.mxu0 0.0
    %812 = vmatprep.subr.mxu0 0.0
    %813 = vmatpush1.msra.mxu0 0.0
    %814 = vmatprep.subr.mxu0 0.0
    %815 = vmatpush1.msra.mxu0 0.0
    %816 = vmatprep.subr.mxu0 0.0
    %817 = vmatpush1.msra.mxu0 0.0
    %818 = vmatprep.subr.mxu0 0.0
    %819 = vmatpush1.msra.mxu0 0.0
    %820 = vmatprep.subr.mxu0 0.0
    %821 = vmatpush1.msra.mxu0 0.0
    %822 = vmatprep.subr.mxu0 0.0
    %823 = vmatpush1.msra.mxu0 0.0
    %824 = vmatprep.subr.mxu0 0.0
    %825 = vmatpush1.msra.mxu0 0.0
    %826 = vmatprep.subr.mxu0 0.0
    %827 = vmatpush1.msra.mxu0 0.0
    %828 = vmatprep.subr.mxu0 0.0
    %829 = vmatpush1.msra.mxu0 0.0
    %830 = vmatprep.subr.mxu0 0.0
    %831 = vmatpush1.msra.mxu0 0.0
    %832 = vmatprep.subr.mxu0 0.0
    %833 = vmatpush1.msra.mxu0 0.0
    %834 = vmatprep.subr.mxu0 0.0
    %835 = vmatpush1.msra.mxu0 0.0
    %836 = vmatprep.subr.mxu0 0.0
    %837 = vmatpush1.msra.mxu0 0.0
    %838 = vmatprep.subr.mxu0 0.0
    %839 = vmatpush1.msra.mxu0 0.0
    %840 = vmatprep.subr.mxu0 0.0
    %841 = vmatpush1.msra.mxu0 0.0
    %842 = vmatprep.subr.mxu0 0.0
    %843 = vmatpush1.msra.mxu0 0.0
    %844 = vmatprep.subr.mxu0 0.0
    %845 = vmatpush1.msra.mxu0 0.0
    %846 = vmatprep.subr.mxu0 0.0
    %847 = vmatpush1.msra.mxu0 0.0
    %848 = vmatprep.mubr.f32.mxu0 0.0
    %v849 = vand.u32 %v546, 4294901760
    %v850 = vsub.f32 %v546, %v849
    %v851 = vand.u32 %v850, 4294901760
    %852 = vmatmul.mubr.f32.gmra.mrb[0].mxu0 %v851
    %v853 = vpop.f32.mrb[0].mxu0
    %v854 = vadd.f32 %v779, %v853
    %v855 = vpop.f32.mrb[0].mxu0
    %856 = vdwg.mxu0
    %857 = vmatprep.subr.mxu0 0.0
    %v858 = vand.u32 %v535, 4294901760
    %v859 = vsub.f32 %v535, %v858
    %v860 = vand.u32 %v859, 4294901760
    %861 = vmatpush1.msra.mxu0 %v860
    %862 = vmatprep.subr.mxu0 0.0
    %v863 = vand.u32 %v536, 4294901760
    %v864 = vsub.f32 %v536, %v863
    %v865 = vand.u32 %v864, 4294901760
    %866 = vmatpush1.msra.mxu0 %v865
    %867 = vmatprep.subr.mxu0 0.0
    %868 = vmatpush1.msra.mxu0 0.0
    %869 = vmatprep.subr.mxu0 0.0
    %870 = vmatpush1.msra.mxu0 0.0
    %871 = vmatprep.subr.mxu0 0.0
    %872 = vmatpush1.msra.mxu0 0.0
    %873 = vmatprep.subr.mxu0 0.0
    %874 = vmatpush1.msra.mxu0 0.0
    %875 = vmatprep.subr.mxu0 0.0
    %876 = vmatpush1.msra.mxu0 0.0
    %877 = vmatprep.subr.mxu0 0.0
    %878 = vmatpush1.msra.mxu0 0.0
    %879 = vmatprep.subr.mxu0 0.0
    %880 = vmatpush1.msra.mxu0 0.0
    %881 = vmatprep.subr.mxu0 0.0
    %882 = vmatpush1.msra.mxu0 0.0
    %883 = vmatprep.subr.mxu0 0.0
    %884 = vmatpush1.msra.mxu0 0.0
    %885 = vmatprep.subr.mxu0 0.0
    %886 = vmatpush1.msra.mxu0 0.0
    %887 = vmatprep.subr.mxu0 0.0
    %888 = vmatpush1.msra.mxu0 0.0
    %889 = vmatprep.subr.mxu0 0.0
    %890 = vmatpush1.msra.mxu0 0.0
    %891 = vmatprep.subr.mxu0 0.0
    %892 = vmatpush1.msra.mxu0 0.0
    %893 = vmatprep.subr.mxu0 0.0
    %894 = vmatpush1.msra.mxu0 0.0
    %895 = vmatprep.subr.mxu0 0.0
    %896 = vmatpush1.msra.mxu0 0.0
    %897 = vmatprep.subr.mxu0 0.0
    %898 = vmatpush1.msra.mxu0 0.0
    %899 = vmatprep.subr.mxu0 0.0
    %900 = vmatpush1.msra.mxu0 0.0
    %901 = vmatprep.subr.mxu0 0.0
    %902 = vmatpush1.msra.mxu0 0.0
    %903 = vmatprep.subr.mxu0 0.0
    %904 = vmatpush1.msra.mxu0 0.0
    %905 = vmatprep.subr.mxu0 0.0
    %906 = vmatpush1.msra.mxu0 0.0
    %907 = vmatprep.subr.mxu0 0.0
    %908 = vmatpush1.msra.mxu0 0.0
    %909 = vmatprep.subr.mxu0 0.0
    %910 = vmatpush1.msra.mxu0 0.0
    %911 = vmatprep.subr.mxu0 0.0
    %912 = vmatpush1.msra.mxu0 0.0
    %913 = vmatprep.subr.mxu0 0.0
    %914 = vmatpush1.msra.mxu0 0.0
    %915 = vmatprep.subr.mxu0 0.0
    %916 = vmatpush1.msra.mxu0 0.0
    %917 = vmatprep.subr.mxu0 0.0
    %918 = vmatpush1.msra.mxu0 0.0
    %919 = vmatprep.subr.mxu0 0.0
    %920 = vmatpush1.msra.mxu0 0.0
    %921 = vmatprep.subr.mxu0 0.0
    %922 = vmatpush1.msra.mxu0 0.0
    %923 = vmatprep.subr.mxu0 0.0
    %924 = vmatpush1.msra.mxu0 0.0
    %925 = vmatprep.subr.mxu0 0.0
    %926 = vmatpush1.msra.mxu0 0.0
    %927 = vmatprep.mubr.f32.mxu0 0.0
    %v928 = vand.u32 %v546, 4294901760
    %929 = vmatmul.mubr.f32.gmra.mrb[0].mxu0 %v928
    %v930 = vpop.f32.mrb[0].mxu0
    %v931 = vadd.f32 %v854, %v930
    %v932 = vpop.f32.mrb[0].mxu0
    %933 = vdwg.mxu0
    %934 = vmatprep.subr.mxu0 0.0
    %v935 = vand.u32 %v535, 4294901760
    %936 = vmatpush1.msra.mxu0 %v935
    %937 = vmatprep.subr.mxu0 0.0
    %v938 = vand.u32 %v536, 4294901760
    %939 = vmatpush1.msra.mxu0 %v938
    %940 = vmatprep.subr.mxu0 0.0
    %941 = vmatpush1.msra.mxu0 0.0
    %942 = vmatprep.subr.mxu0 0.0
    %943 = vmatpush1.msra.mxu0 0.0
    %944 = vmatprep.subr.mxu0 0.0
    %945 = vmatpush1.msra.mxu0 0.0
    %946 = vmatprep.subr.mxu0 0.0
    %947 = vmatpush1.msra.mxu0 0.0
    %948 = vmatprep.subr.mxu0 0.0
    %949 = vmatpush1.msra.mxu0 0.0
    %950 = vmatprep.subr.mxu0 0.0
    %951 = vmatpush1.msra.mxu0 0.0
    %952 = vmatprep.subr.mxu0 0.0
    %953 = vmatpush1.msra.mxu0 0.0
    %954 = vmatprep.subr.mxu0 0.0
    %955 = vmatpush1.msra.mxu0 0.0
    %956 = vmatprep.subr.mxu0 0.0
    %957 = vmatpush1.msra.mxu0 0.0
    %958 = vmatprep.subr.mxu0 0.0
    %959 = vmatpush1.msra.mxu0 0.0
    %960 = vmatprep.subr.mxu0 0.0
    %961 = vmatpush1.msra.mxu0 0.0
    %962 = vmatprep.subr.mxu0 0.0
    %963 = vmatpush1.msra.mxu0 0.0
    %964 = vmatprep.subr.mxu0 0.0
    %965 = vmatpush1.msra.mxu0 0.0
    %966 = vmatprep.subr.mxu0 0.0
    %967 = vmatpush1.msra.mxu0 0.0
    %968 = vmatprep.subr.mxu0 0.0
    %969 = vmatpush1.msra.mxu0 0.0
    %970 = vmatprep.subr.mxu0 0.0
    %971 = vmatpush1.msra.mxu0 0.0
    %972 = vmatprep.subr.mxu0 0.0
    %973 = vmatpush1.msra.mxu0 0.0
    %974 = vmatprep.subr.mxu0 0.0
    %975 = vmatpush1.msra.mxu0 0.0
    %976 = vmatprep.subr.mxu0 0.0
    %977 = vmatpush1.msra.mxu0 0.0
    %978 = vmatprep.subr.mxu0 0.0
    %979 = vmatpush1.msra.mxu0 0.0
    %980 = vmatprep.subr.mxu0 0.0
    %981 = vmatpush1.msra.mxu0 0.0
    %982 = vmatprep.subr.mxu0 0.0
    %983 = vmatpush1.msra.mxu0 0.0
    %984 = vmatprep.subr.mxu0 0.0
    %985 = vmatpush1.msra.mxu0 0.0
    %986 = vmatprep.subr.mxu0 0.0
    %987 = vmatpush1.msra.mxu0 0.0
    %988 = vmatprep.subr.mxu0 0.0
    %989 = vmatpush1.msra.mxu0 0.0
    %990 = vmatprep.subr.mxu0 0.0
    %991 = vmatpush1.msra.mxu0 0.0
    %992 = vmatprep.subr.mxu0 0.0
    %993 = vmatpush1.msra.mxu0 0.0
    %994 = vmatprep.subr.mxu0 0.0
    %995 = vmatpush1.msra.mxu0 0.0
    %996 = vmatprep.subr.mxu0 0.0
    %997 = vmatpush1.msra.mxu0 0.0
    %998 = vmatprep.subr.mxu0 0.0
    %999 = vmatpush1.msra.mxu0 0.0
    %1000 = vmatprep.mubr.f32.mxu0 0.0
    %v1001 = vand.u32 %v546, 4294901760
    %1002 = vmatmul.mubr.f32.gmra.mrb[0].mxu0 %v1001
    %v1003 = vpop.f32.mrb[0].mxu0
    %v1004 = vadd.f32 %v931, %v1003
    %v1005 = vpop.f32.mrb[0].mxu0
    %1006 = vdwg.mxu0
    %vm1007 = vcmask 61440
    %1008 = vst.msk [vmem:[#allocation2] sm:$0x1f] %vm1007, %v1004
    // Predicated region
    $region22: #{tpu_custom_call.1} parent=1 // pred_check
      _
    $region23: #{tpu_custom_call.1} parent=1 // pred_check_branch
      %1010 = sbr.rel (0) target = $region25
    $region24: #{tpu_custom_call.1} parent=1 // pred_region
      %s1012 = ssub.s32 128, 128
      %1013 = vsyncadd [#allocation3], %s1012
      %s1015 = sshll.u32 [#allocation2], 4
      %s1016 = int_to_ptr.vmem [resolvable:$true] %s1015
      %1018 = dma.vmem_to_hbm [thread:$0]  %s1016, 128, %s5, [#allocation3]
    $region25: #{tpu_custom_call.1} parent=1 // pred_fallthru
      _
    // Predicated region
    $region26: #{tpu_custom_call.1} parent=1 // pred_check
      _
    $region27: #{tpu_custom_call.1} parent=1 // pred_check_branch
      %1020 = sbr.rel (0) target = $region29
    $region28: #{tpu_custom_call.1} parent=1 // pred_region
      %1021 = dma.done [#allocation3], 128
    $region29: #{tpu_custom_call.1} parent=1 // pred_fallthru
      _
    %1022 = vsyncpa [#allocation3], 1

</llo_original>
